<compile_context>
chip_gen: v6e
topology: v6e:2x2x1
jax: 0.10.0
libtpu: 0.0.40
codegen_flags: <defaults>
</compile_context>

<pallas_src>
import functools

import jax
import jax.numpy as jnp
import numpy as np
from jax import lax
from jax.experimental import pallas as pl
from jax.experimental.pallas import tpu as pltpu


def _round_up(v, m):
    return ((v + m - 1) // m) * m


def _conv_feature_kernel(x_ref, wt_ref, w2_ref, f_ref, *, activation):
    """F = activation(sqrt(max(||x||^2 + ||W||^2 - 2 x.W, 0)))."""
    x = x_ref[...]                       # (TB, D)  f32 batch tile
    wt = wt_ref[...]                     # (D, TW)  f32 transposed weight tile
    # Cross term on the MXU, f32 accumulation. K = D is intentionally not
    # padded/tiled: starved MXU passes are free in this mem/EUP-bound kernel.
    xw = lax.dot_general(
        x, wt, dimension_numbers=(((1,), (0,)), ((), ())),
        preferred_element_type=jnp.float32)                       # (TB, TW)
    x2 = jnp.sum(x * x, axis=1, keepdims=True)                    # (TB, 1)
    # w2_ref holds the hoisted, loop-invariant ||W[w]||^2 row: (1, TW).
    d2 = jnp.maximum(x2 + w2_ref[...] - 2.0 * xw, 0.0)            # clamp cancellation
    out_dtype = f_ref.dtype
    if out_dtype == jnp.float32:
        f_ref[...] = activation(jnp.sqrt(d2))
    else:
        # bf16 sqrt + activation (v6e/v7x EUP supports bf16) and halved writeback.
        f_ref[...] = activation(jnp.sqrt(d2.astype(out_dtype))).astype(out_dtype)


def _vmem_capacity_bytes():
    try:
        return int(pltpu.get_tpu_info().vmem_capacity_bytes)
    except Exception:
        return 64 * 1024 * 1024          # conservative (v7x-sized) fallback


def conv_feature_forward(x, weight, activation=jnp.tanh, *,
                         out_dtype=jnp.float32,
                         block_b=512, block_w=None,
                         vmem_budget_bytes=None, vmem_limit_bytes=None):
    """F[b, w] = activation(||weight[w] - x[b]||_2). Identity projection only."""
    # TODO(synk): non-Identity `projection` modules (an arbitrary nn.Module applied
    # to the (B, input_dim, width) difference tensor) have no generic Pallas equivalent.
    x = jnp.asarray(x, jnp.float32)
    weight = jnp.asarray(weight, jnp.float32)
    B, D = x.shape
    Wd, D2 = weight.shape
    assert D == D2, "weight must be (width, input_dim) matching x's input_dim"

    out_dtype = jnp.dtype(out_dtype)
    out_itemsize = out_dtype.itemsize
    sub = 16 if out_itemsize < 4 else 8   # sublane multiple of the output tile

    # Generation-aware VMEM budgets: big tiles on 128 MiB parts (v5e/v6e),
    # conservative budget/limit on the 64 MiB v7x.
    cap = _vmem_capacity_bytes()
    if cap >= 96 * 1024 * 1024:
        budget = 80 * 1024 * 1024 if vmem_budget_bytes is None else vmem_budget_bytes
        limit = 100 * 1024 * 1024 if vmem_limit_bytes is None else vmem_limit_bytes
    else:
        budget = 24 * 1024 * 1024 if vmem_budget_bytes is None else vmem_budget_bytes
        limit = 48 * 1024 * 1024 if vmem_limit_bytes is None else vmem_limit_bytes

    Wp0 = _round_up(Wd, 128)              # lane-dense width
    tb_cap = min(_round_up(block_b, sub), _round_up(B, sub))

    # Honest working-set estimate: ALL pipelined operands double-buffered,
    # including the constant-index weight / w2 blocks.
    def est(tb, tw):
        return (4 * (2 * tb * D + 2 * D * tw + 2 * tw)
                + out_itemsize * 2 * tb * tw)

    def best_tb(tw):
        t = tb_cap
        while t > sub and est(t, tw) > budget:
            t = max(sub, _round_up(t // 2, sub))
        return t

    if block_w is not None:
        tw = min(_round_up(block_w, 128), Wp0)
    else:
        # Prefer shrinking the width tile (multiples of 256) over collapsing the
        # batch tile: keeps stores lane-dense and tb >= ~256 under small VMEM.
        tw = Wp0
        target_tb = min(tb_cap, _round_up(256, sub))
        while tw > 256 and est(target_tb, tw) > budget:
            tw = max(256, _round_up(tw // 2, 256))
        if tw > 128 and est(best_tb(tw), tw) > budget:
            tw = 128
    tb = best_tb(tw)
    if est(tb, tw) > budget:
        raise ValueError(
            f"ConvolutionFeatureModel tiles do not fit the VMEM budget "
            f"({budget} bytes) even at tb={tb}, tw={tw}; raise vmem_budget_bytes "
            f"or reduce input_dim/width.")

    Bp = _round_up(B, tb)
    Wp = _round_up(Wp0, tw)

    x_pad = x if Bp == B else jnp.zeros((Bp, D), jnp.float32).at[:B, :].set(x)
    wt = weight.T if Wp == Wd else (
        jnp.zeros((D, Wp), jnp.float32).at[:, :Wd].set(weight.T))
    w2 = jnp.sum(weight * weight, axis=1)            # hoisted ||W[w]||^2 (width,)
    w2 = (w2 if Wp == Wd
          else jnp.zeros((Wp,), jnp.float32).at[:Wd].set(w2)).reshape(1, Wp)

    out = pl.pallas_call(
        functools.partial(_conv_feature_kernel, activation=activation),
        grid=(Bp // tb, Wp // tw),
        in_specs=[
            pl.BlockSpec((tb, D), lambda i, j: (i, 0)),   # batch tile of x
            pl.BlockSpec((D, tw), lambda i, j: (0, j)),   # width tile of W^T
            pl.BlockSpec((1, tw), lambda i, j: (0, j)),   # hoisted ||W||^2 row
        ],
        out_specs=pl.BlockSpec((tb, tw), lambda i, j: (i, j)),
        out_shape=jax.ShapeDtypeStruct((Bp, Wp), out_dtype),
        compiler_params=pltpu.CompilerParams(
            dimension_semantics=("parallel", "parallel"),  # independent tiles
            vmem_limit_bytes=limit,
        ),
    )(x_pad, wt, w2)

    if Bp == B and Wp == Wd:
        return out           # aligned shapes: skip the extra HBM unpad copy
    return out[:B, :Wd]


def _reference(x, weight, activation=jnp.tanh):
    # Direct translation of the PyTorch forward (Identity projection).
    diff = weight.T[None, :, :] - x[:, :, None]          # (B, D, width)
    return activation(jnp.linalg.norm(diff, axis=1))


if __name__ == "__main__":
    k0, k1, k2, k3 = jax.random.split(jax.random.PRNGKey(0), 4)

    # Case 1: exercises batch + width padding, f32 output (tight check).
    B, D_in, width = 60, 16, 100
    x = 0.2 * jax.random.normal(k0, (B, D_in), dtype=jnp.float32)
    weight = 0.2 * jax.random.normal(k1, (width, D_in), dtype=jnp.float32)

    feats = jax.block_until_ready(conv_feature_forward(x, weight, jnp.tanh))
    ref = jax.block_until_ready(_reference(x, weight, jnp.tanh))
    assert feats.shape == (B, width)
    np.testing.assert_allclose(np.asarray(feats), np.asarray(ref),
                               rtol=5e-3, atol=5e-3)

    # Case 1b: bf16-output path (halved HBM writeback, bf16 sqrt/tanh) — looser check.
    feats_bf16 = jax.block_until_ready(
        conv_feature_forward(x, weight, jnp.tanh, out_dtype=jnp.bfloat16))
    np.testing.assert_allclose(np.asarray(feats_bf16, dtype=np.float32),
                               np.asarray(ref), rtol=2e-2, atol=2e-2)

    # Case 2: exercises the 2-D (batch, width) grid via an explicit width tile.
    B2, W2 = 40, 300
    x2 = 0.3 * jax.random.normal(k2, (B2, D_in), dtype=jnp.float32)
    w2 = 0.3 * jax.random.normal(k3, (W2, D_in), dtype=jnp.float32)
    feats2 = jax.block_until_ready(
        conv_feature_forward(x2, w2, jnp.tanh, block_b=32, block_w=128))
    ref2 = jax.block_until_ready(_reference(x2, w2, jnp.tanh))
    assert feats2.shape == (B2, W2)
    np.testing.assert_allclose(np.asarray(feats2), np.asarray(ref2),
                               rtol=5e-3, atol=5e-3)

    print("KERNEL_OK")
</pallas_src>

<mosaic_0001>
module attributes {stable_mosaic.version = 11 : i64} {
  func.func @_conv_feature_kernel(%arg0: i32, %arg1: i32, %arg2: memref<64x16xf32, #tpu.memory_space<vmem>>, %arg3: memref<16x128xf32, #tpu.memory_space<vmem>>, %arg4: memref<1x128xf32, #tpu.memory_space<vmem>>, %arg5: memref<64x128xf32, #tpu.memory_space<vmem>>) attributes {dimension_semantics = [#tpu.dimension_semantics<parallel>, #tpu.dimension_semantics<parallel>], iteration_bounds = array<i64: 1, 1>, scalar_prefetch = 0 : i64, scratch_operands = 0 : i64, tpu.core_type = #tpu.core_type<tc>, window_params = [{transform_indices = @transform_0, window_bounds = array<i64: 64, 16>}, {transform_indices = @transform_1, window_bounds = array<i64: 16, 128>}, {transform_indices = @transform_2, window_bounds = array<i64: 1, 128>}, {transform_indices = @transform_3, window_bounds = array<i64: 64, 128>}]} {
    %c0 = arith.constant 0 : index
    %c0_0 = arith.constant 0 : index
    %0 = vector.load %arg2[%c0, %c0_0] : memref<64x16xf32, #tpu.memory_space<vmem>>, vector<64x16xf32>
    %c0_1 = arith.constant 0 : index
    %c0_2 = arith.constant 0 : index
    %1 = vector.load %arg3[%c0_1, %c0_2] : memref<16x128xf32, #tpu.memory_space<vmem>>, vector<16x128xf32>
    %cst = arith.constant dense<0.000000e+00> : vector<64x128xf32>
    %2 = tpu.matmul %0, %1, %cst {dimension_numbers = #tpu.dot_dimension_numbers<[1], [0], [0], [1], [0, 0, 1, 1], [], []>} : vector<64x16xf32>, vector<16x128xf32>, vector<64x128xf32> -> vector<64x128xf32>
    %3 = arith.mulf %0, %0 : vector<64x16xf32>
    %cst_3 = arith.constant dense<0.000000e+00> : vector<64xf32>
    %4 = vector.multi_reduction <add>, %3, %cst_3 [1] : vector<64x16xf32> to vector<64xf32>
    %5 = vector.shape_cast %4 : vector<64xf32> to vector<64x1xf32>
    %c0_4 = arith.constant 0 : index
    %c0_5 = arith.constant 0 : index
    %6 = vector.load %arg4[%c0_4, %c0_5] : memref<1x128xf32, #tpu.memory_space<vmem>>, vector<1x128xf32>
    %7 = vector.broadcast %5 : vector<64x1xf32> to vector<64x128xf32>
    %8 = vector.broadcast %6 : vector<1x128xf32> to vector<64x128xf32>
    %9 = arith.addf %7, %8 : vector<64x128xf32>
    %cst_6 = arith.constant 2.000000e+00 : f32
    %10 = vector.broadcast %cst_6 : f32 to vector<64x128xf32>
    %11 = arith.mulf %10, %2 : vector<64x128xf32>
    %12 = arith.subf %9, %11 : vector<64x128xf32>
    %cst_7 = arith.constant 0.000000e+00 : f32
    %13 = vector.broadcast %cst_7 : f32 to vector<64x128xf32>
    %14 = arith.maximumf %12, %13 : vector<64x128xf32>
    %15 = math.sqrt %14 : vector<64x128xf32>
    %16 = math.tanh %15 : vector<64x128xf32>
    %c0_8 = arith.constant 0 : index
    %c0_9 = arith.constant 0 : index
    %17 = vector.load %arg5[%c0_8, %c0_9] : memref<64x128xf32, #tpu.memory_space<vmem>>, vector<64x128xf32>
    tpu.vector_store %arg5[%c0_8, %c0_9], %16 {strides = array<i32>} : memref<64x128xf32, #tpu.memory_space<vmem>>, vector<64x128xf32>,
    return
  }
  func.func @transform_0(%arg0: i32, %arg1: i32) -> (i32, i32) {
    %c0_i32 = arith.constant 0 : i32
    %c0_i32_0 = arith.constant 0 : i32
    return %arg0, %c0_i32 : i32, i32
  }
  func.func @transform_1(%arg0: i32, %arg1: i32) -> (i32, i32) {
    %c0_i32 = arith.constant 0 : i32
    %c0_i32_0 = arith.constant 0 : i32
    return %c0_i32, %arg1 : i32, i32
  }
  func.func @transform_2(%arg0: i32, %arg1: i32) -> (i32, i32) {
    %c0_i32 = arith.constant 0 : i32
    %c0_i32_0 = arith.constant 0 : i32
    return %c0_i32, %arg1 : i32, i32
  }
  func.func @transform_3(%arg0: i32, %arg1: i32) -> (i32, i32) {
    %c0_i32 = arith.constant 0 : i32
    return %arg0, %arg1 : i32, i32
  }
}

</mosaic_0001>

<llo_original>
// kernel: tpu_custom_call.1
$region0: #{tpu_custom_call.1}
  #allocation0 [shape = 'u32[]', space=smem, size = 0x4, offset = 0x4, fixed_abs, tag = 'smem constant byte address 0x4 - core index']
  #allocation1 [shape = 'u32[144,128]{1,0:T(1,128)}', space=vmem, size = 0x12000, scoped, tag = 'internal scratch']
  %s0 = inlined_call_operand.vmem [shape: f32[64,16], index: 0, kind: input, shape index: {}]
  %s1 = inlined_call_operand.vmem [shape: f32[16,128], index: 1, kind: input, shape index: {}]
  %s2 = inlined_call_operand.vmem [shape: f32[1,128], index: 2, kind: input, shape index: {}]
  %s3 = inlined_call_operand.hbm [shape: f32[64,128], index: 3, kind: output, shape index: {}]
  %s4 = sld [smem:[#allocation0]]
  $region22: #{tpu_custom_call.1} parent=0
    _
  %s6 = ssub.s32 1, %s4
  %s7 = scalar_select 0, %s6, %s4
  $region1: #{tpu_custom_call.1} parent=0
    #allocation2 [shape = 'u8[32768]{0}', space=vmem, size = 0x8000, scoped, tag = 'output window, operand 0, single buffered']
    #allocation3 [shape = 's32[1]{0}', space=sflag, size = 0x4, scoped, tag = 'scoped memory for tpu_custom_call.1']
    %8 = vsyncpa [#allocation3], 0
    // Predicated region
    $region2: #{tpu_custom_call.1} parent=1 // pred_check
      _
    $region3: #{tpu_custom_call.1} parent=1 // pred_check_branch
      %10 = sbr.rel (0) target = $region5
    $region4: #{tpu_custom_call.1} parent=1 // pred_region
      _
    $region5: #{tpu_custom_call.1} parent=1 // pred_fallthru
      _
    // Predicated region
    $region6: #{tpu_custom_call.1} parent=1 // pred_check
      _
    $region7: #{tpu_custom_call.1} parent=1 // pred_check_branch
      %12 = sbr.rel (0) target = $region9
    $region8: #{tpu_custom_call.1} parent=1 // pred_region
      _
    $region9: #{tpu_custom_call.1} parent=1 // pred_fallthru
      _
    // Predicated region
    $region10: #{tpu_custom_call.1} parent=1 // pred_check
      _
    $region11: #{tpu_custom_call.1} parent=1 // pred_check_branch
      %14 = sbr.rel (0) target = $region13
    $region12: #{tpu_custom_call.1} parent=1 // pred_region
      _
    $region13: #{tpu_custom_call.1} parent=1 // pred_fallthru
      _
    %v15 = vld [vmem:[%s0] sm:$0xff]
    %v16 = vld [vmem:[%s0 + $0x8] sm:$0xff]
    %v17 = vld [vmem:[%s0 + $0x10] sm:$0xff]
    %v18 = vld [vmem:[%s0 + $0x18] sm:$0xff]
    %v19 = vld [vmem:[%s0 + $0x20] sm:$0xff]
    %v20 = vld [vmem:[%s0 + $0x28] sm:$0xff]
    %v21 = vld [vmem:[%s0 + $0x30] sm:$0xff]
    %v22 = vld [vmem:[%s0 + $0x38] sm:$0xff]
    %v23 = vld [vmem:[%s1] sm:$0xff]
    %v24 = vld [vmem:[%s1 + $0x8] sm:$0xff]
    %vm25 = vcmask 130048
    %v27 = vsel %vm25, %v15, 0
    %v30 = vsel %vm25, %v16, 0
    %v33 = vsel %vm25, %v17, 0
    %v36 = vsel %vm25, %v18, 0
    %v39 = vsel %vm25, %v19, 0
    %v42 = vsel %vm25, %v20, 0
    %v45 = vsel %vm25, %v21, 0
    %v48 = vsel %vm25, %v22, 0
    %50 = vmatprep.subr.mxu0 0.0
    %51 = vmatpush1.msra.mxu0 0.0
    %52 = vmatprep.subr.mxu0 0.0
    %53 = vmatpush1.msra.mxu0 0.0
    %54 = vmatprep.subr.mxu0 0.0
    %55 = vmatpush1.msra.mxu0 0.0
    %56 = vmatprep.subr.mxu0 0.0
    %57 = vmatpush1.msra.mxu0 0.0
    %58 = vmatprep.subr.mxu0 0.0
    %59 = vmatpush1.msra.mxu0 0.0
    %60 = vmatprep.subr.mxu0 0.0
    %61 = vmatpush1.msra.mxu0 0.0
    %62 = vmatprep.subr.mxu0 0.0
    %63 = vmatpush1.msra.mxu0 0.0
    %64 = vmatprep.subr.mxu0 0.0
    %65 = vmatpush1.msra.mxu0 0.0
    %66 = vmatprep.subr.mxu0 0.0
    %67 = vmatpush1.msra.mxu0 0.0
    %68 = vmatprep.subr.mxu0 0.0
    %69 = vmatpush1.msra.mxu0 0.0
    %70 = vmatprep.subr.mxu0 0.0
    %71 = vmatpush1.msra.mxu0 0.0
    %72 = vmatprep.subr.mxu0 0.0
    %73 = vmatpush1.msra.mxu0 0.0
    %74 = vmatprep.subr.mxu0 0.0
    %75 = vmatpush1.msra.mxu0 0.0
    %76 = vmatprep.subr.mxu0 0.0
    %77 = vmatpush1.msra.mxu0 0.0
    %78 = vmatprep.subr.mxu0 0.0
    %79 = vmatpush1.msra.mxu0 %v24
    %80 = vmatprep.subr.mxu0 0.0
    %81 = vmatpush1.msra.mxu0 %v23
    %82 = vmatprep.subr.mxu0 0.0
    %83 = vmatpush2.msra.mxu0 0.0
    %84 = vmatprep.subr.mxu0 0.0
    %85 = vmatpush2.msra.mxu0 0.0
    %86 = vmatprep.subr.mxu0 0.0
    %87 = vmatpush2.msra.mxu0 0.0
    %88 = vmatprep.subr.mxu0 0.0
    %89 = vmatpush2.msra.mxu0 0.0
    %90 = vmatprep.subr.mxu0 0.0
    %91 = vmatpush2.msra.mxu0 0.0
    %92 = vmatprep.subr.mxu0 0.0
    %93 = vmatpush2.msra.mxu0 0.0
    %94 = vmatprep.subr.mxu0 0.0
    %95 = vmatpush2.msra.mxu0 0.0
    %96 = vmatprep.subr.mxu0 0.0
    %97 = vmatpush2.msra.mxu0 0.0
    %98 = vmatprep.subr.mxu0 0.0
    %99 = vmatpush2.msra.mxu0 0.0
    %100 = vmatprep.subr.mxu0 0.0
    %101 = vmatpush2.msra.mxu0 0.0
    %102 = vmatprep.subr.mxu0 0.0
    %103 = vmatpush2.msra.mxu0 0.0
    %104 = vmatprep.subr.mxu0 0.0
    %105 = vmatpush2.msra.mxu0 0.0
    %106 = vmatprep.subr.mxu0 0.0
    %107 = vmatpush2.msra.mxu0 0.0
    %108 = vmatprep.subr.mxu0 0.0
    %109 = vmatpush2.msra.mxu0 0.0
    %110 = vmatprep.subr.mxu0 0.0
    %111 = vmatpush2.msra.mxu0 0.0
    %112 = vmatprep.subr.mxu0 0.0
    %113 = vmatpush2.msra.mxu0 0.0
    %114 = vmatprep.mubr.f32.mxu0 0.0
    %115 = vmatmul.mubr.f32.gmra.mxu0 %v27
    %v116 = vpop.f32.mrf.mxu0
    %v117 = vadd.f32 0.0, %v116
    %v118 = vpop.f32.mrf.mxu0
    %119 = vmatprep.mubr.f32.mxu0 0.0
    %120 = vmatmul.mubr.f32.gmra.mxu0 %v30
    %v121 = vpop.f32.mrf.mxu0
    %v122 = vadd.f32 0.0, %v121
    %v123 = vpop.f32.mrf.mxu0
    %124 = vmatprep.mubr.f32.mxu0 0.0
    %125 = vmatmul.mubr.f32.gmra.mxu0 %v33
    %v126 = vpop.f32.mrf.mxu0
    %v127 = vadd.f32 0.0, %v126
    %v128 = vpop.f32.mrf.mxu0
    %129 = vmatprep.mubr.f32.mxu0 0.0
    %130 = vmatmul.mubr.f32.gmra.mxu0 %v36
    %v131 = vpop.f32.mrf.mxu0
    %v132 = vadd.f32 0.0, %v131
    %v133 = vpop.f32.mrf.mxu0
    %134 = vmatprep.mubr.f32.mxu0 0.0
    %135 = vmatmul.mubr.f32.gmra.mxu0 %v39
    %v136 = vpop.f32.mrf.mxu0
    %v137 = vadd.f32 0.0, %v136
    %v138 = vpop.f32.mrf.mxu0
    %139 = vmatprep.mubr.f32.mxu0 0.0
    %140 = vmatmul.mubr.f32.gmra.mxu0 %v42
    %v141 = vpop.f32.mrf.mxu0
    %v142 = vadd.f32 0.0, %v141
    %v143 = vpop.f32.mrf.mxu0
    %144 = vmatprep.mubr.f32.mxu0 0.0
    %145 = vmatmul.mubr.f32.gmra.mxu0 %v45
    %v146 = vpop.f32.mrf.mxu0
    %v147 = vadd.f32 0.0, %v146
    %v148 = vpop.f32.mrf.mxu0
    %149 = vmatprep.mubr.f32.mxu0 0.0
    %150 = vmatmul.mubr.f32.gmra.mxu0 %v48
    %v151 = vpop.f32.mrf.mxu0
    %v152 = vadd.f32 0.0, %v151
    %v153 = vpop.f32.mrf.mxu0
    %154 = vdwg.mxu0
    %v155 = vmul.f32 %v15, %v15
    %v156 = vmul.f32 %v16, %v16
    %v157 = vmul.f32 %v17, %v17
    %v158 = vmul.f32 %v18, %v18
    %v159 = vmul.f32 %v19, %v19
    %v160 = vmul.f32 %v20, %v20
    %v161 = vmul.f32 %v21, %v21
    %v162 = vmul.f32 %v22, %v22
    %v163 = vsel %vm25, %v155, 0.0
    %164 = vadd.xlane.f32.xlu0 %v163
    %v165 = vpop.xlane.xlu0 %164
    %v166 = vsel %vm25, %v156, 0.0
    %167 = vadd.xlane.f32.xlu0 %v166
    %v168 = vpop.xlane.xlu0 %167
    %v169 = vsel %vm25, %v157, 0.0
    %170 = vadd.xlane.f32.xlu0 %v169
    %v171 = vpop.xlane.xlu0 %170
    %v172 = vsel %vm25, %v158, 0.0
    %173 = vadd.xlane.f32.xlu0 %v172
    %v174 = vpop.xlane.xlu0 %173
    %v175 = vsel %vm25, %v159, 0.0
    %176 = vadd.xlane.f32.xlu0 %v175
    %v177 = vpop.xlane.xlu0 %176
    %v178 = vsel %vm25, %v160, 0.0
    %179 = vadd.xlane.f32.xlu0 %v178
    %v180 = vpop.xlane.xlu0 %179
    %v181 = vsel %vm25, %v161, 0.0
    %182 = vadd.xlane.f32.xlu0 %v181
    %v183 = vpop.xlane.xlu0 %182
    %v184 = vsel %vm25, %v162, 0.0
    %185 = vadd.xlane.f32.xlu0 %v184
    %v186 = vpop.xlane.xlu0 %185
    %v187 = vld [vmem:[%s2] sm:$0x1]
    %v189 = vlaneseq
    %v190 = vshrl.u32 %v189, 7
    %v191 = vsub.s32 0, %v190
    %v192 = vrot.slane %v187, %v191
    %v194 = vadd.f32 %v165, %v192
    %v195 = vadd.f32 %v168, %v192
    %v196 = vadd.f32 %v171, %v192
    %v197 = vadd.f32 %v174, %v192
    %v198 = vadd.f32 %v177, %v192
    %v199 = vadd.f32 %v180, %v192
    %v200 = vadd.f32 %v183, %v192
    %v201 = vadd.f32 %v186, %v192
    %v202 = vmul.f32 %v117, 2.0
    %v203 = vmul.f32 %v122, 2.0
    %v204 = vmul.f32 %v127, 2.0
    %v205 = vmul.f32 %v132, 2.0
    %v206 = vmul.f32 %v137, 2.0
    %v207 = vmul.f32 %v142, 2.0
    %v208 = vmul.f32 %v147, 2.0
    %v209 = vmul.f32 %v152, 2.0
    %v210 = vsub.f32 %v194, %v202
    %v211 = vsub.f32 %v195, %v203
    %v212 = vsub.f32 %v196, %v204
    %v213 = vsub.f32 %v197, %v205
    %v214 = vsub.f32 %v198, %v206
    %v215 = vsub.f32 %v199, %v207
    %v216 = vsub.f32 %v200, %v208
    %v217 = vsub.f32 %v201, %v209
    %v218 = vmax.f32 %v210, 0.0
    %v219 = vmax.f32 %v211, 0.0
    %v220 = vmax.f32 %v212, 0.0
    %v221 = vmax.f32 %v213, 0.0
    %v222 = vmax.f32 %v214, 0.0
    %v223 = vmax.f32 %v215, 0.0
    %v224 = vmax.f32 %v216, 0.0
    %v225 = vmax.f32 %v217, 0.0
    %v226 = vrsqrt.pop %v218
    %v227 = vmul.f32 %v218, %v226
    %vm228 = vcmp.eq.f32.partialorder %v218, inf
    %v229 = vsel %vm228, %v218, %v227
    %vm230 = vcmp.eq.f32.partialorder %v218, 0.0
    %v231 = vand.u32 %v218, 2147483648
    %v232 = vsel %vm230, %v231, %v229
    %v233 = vrsqrt.pop %v219
    %v234 = vmul.f32 %v219, %v233
    %vm235 = vcmp.eq.f32.partialorder %v219, inf
    %v236 = vsel %vm235, %v219, %v234
    %vm237 = vcmp.eq.f32.partialorder %v219, 0.0
    %v238 = vand.u32 %v219, 2147483648
    %v239 = vsel %vm237, %v238, %v236
    %v240 = vrsqrt.pop %v220
    %v241 = vmul.f32 %v220, %v240
    %vm242 = vcmp.eq.f32.partialorder %v220, inf
    %v243 = vsel %vm242, %v220, %v241
    %vm244 = vcmp.eq.f32.partialorder %v220, 0.0
    %v245 = vand.u32 %v220, 2147483648
    %v246 = vsel %vm244, %v245, %v243
    %v247 = vrsqrt.pop %v221
    %v248 = vmul.f32 %v221, %v247
    %vm249 = vcmp.eq.f32.partialorder %v221, inf
    %v250 = vsel %vm249, %v221, %v248
    %vm251 = vcmp.eq.f32.partialorder %v221, 0.0
    %v252 = vand.u32 %v221, 2147483648
    %v253 = vsel %vm251, %v252, %v250
    %v254 = vrsqrt.pop %v222
    %v255 = vmul.f32 %v222, %v254
    %vm256 = vcmp.eq.f32.partialorder %v222, inf
    %v257 = vsel %vm256, %v222, %v255
    %vm258 = vcmp.eq.f32.partialorder %v222, 0.0
    %v259 = vand.u32 %v222, 2147483648
    %v260 = vsel %vm258, %v259, %v257
    %v261 = vrsqrt.pop %v223
    %v262 = vmul.f32 %v223, %v261
    %vm263 = vcmp.eq.f32.partialorder %v223, inf
    %v264 = vsel %vm263, %v223, %v262
    %vm265 = vcmp.eq.f32.partialorder %v223, 0.0
    %v266 = vand.u32 %v223, 2147483648
    %v267 = vsel %vm265, %v266, %v264
    %v268 = vrsqrt.pop %v224
    %v269 = vmul.f32 %v224, %v268
    %vm270 = vcmp.eq.f32.partialorder %v224, inf
    %v271 = vsel %vm270, %v224, %v269
    %vm272 = vcmp.eq.f32.partialorder %v224, 0.0
    %v273 = vand.u32 %v224, 2147483648
    %v274 = vsel %vm272, %v273, %v271
    %v275 = vrsqrt.pop %v225
    %v276 = vmul.f32 %v225, %v275
    %vm277 = vcmp.eq.f32.partialorder %v225, inf
    %v278 = vsel %vm277, %v225, %v276
    %vm279 = vcmp.eq.f32.partialorder %v225, 0.0
    %v280 = vand.u32 %v225, 2147483648
    %v281 = vsel %vm279, %v280, %v278
    %v282 = vtanh.pop %v232
    %v283 = vtanh.pop %v239
    %v284 = vtanh.pop %v246
    %v285 = vtanh.pop %v253
    %v286 = vtanh.pop %v260
    %v287 = vtanh.pop %v267
    %v288 = vtanh.pop %v274
    %v289 = vtanh.pop %v281
    %290 = vst [vmem:[#allocation2] sm:$0xff] %v282
    %291 = vst [vmem:[#allocation2 + $0x8] sm:$0xff] %v283
    %292 = vst [vmem:[#allocation2 + $0x10] sm:$0xff] %v284
    %293 = vst [vmem:[#allocation2 + $0x18] sm:$0xff] %v285
    %294 = vst [vmem:[#allocation2 + $0x20] sm:$0xff] %v286
    %295 = vst [vmem:[#allocation2 + $0x28] sm:$0xff] %v287
    %296 = vst [vmem:[#allocation2 + $0x30] sm:$0xff] %v288
    %297 = vst [vmem:[#allocation2 + $0x38] sm:$0xff] %v289
    // Predicated region
    $region14: #{tpu_custom_call.1} parent=1 // pred_check
      _
    $region15: #{tpu_custom_call.1} parent=1 // pred_check_branch
      %299 = sbr.rel (0) target = $region17
    $region16: #{tpu_custom_call.1} parent=1 // pred_region
      %s301 = ssub.s32 1024, 1024
      %302 = vsyncadd [#allocation3], %s301
      %s303 = sshll.u32 [#allocation2], 4
      %s304 = int_to_ptr.vmem [resolvable:$true] %s303
      %309 = dma.vmem_to_hbm [thread:$0]  %s304, 1024, %s3, [#allocation3], 128, 128, 8
    $region17: #{tpu_custom_call.1} parent=1 // pred_fallthru
      _
    // Predicated region
    $region18: #{tpu_custom_call.1} parent=1 // pred_check
      _
    $region19: #{tpu_custom_call.1} parent=1 // pred_check_branch
      %311 = sbr.rel (0) target = $region21
    $region20: #{tpu_custom_call.1} parent=1 // pred_region
      %312 = dma.done [#allocation3], 1024
    $region21: #{tpu_custom_call.1} parent=1 // pred_fallthru
      _
    %313 = vsyncpa [#allocation3], 1

</llo_original>
